<compile_context>
chip_gen: v5e
topology: v5e:2x2
jax: 0.10.0
libtpu: 0.0.40
codegen_flags: <defaults>
</compile_context>

<pallas_src>
import jax
import jax.numpy as jnp
from jax.experimental import pallas as pl
from jax.experimental.pallas import tpu as pltpu


# ----------------------------- kernels ------------------------------------ #
# Inputs arrive with their raw leading layer dim: h/c/x refs are (1, B, D);
# weight refs are (D, N) pre-transposed; bias ref is (1, N); output is (B, N).

def _lstm_bias_kernel(h_ref, c_ref, wh_ref, wc_ref, b_ref, o_ref):
    acc = jnp.dot(h_ref[0], wh_ref[...], preferred_element_type=jnp.float32)
    acc = acc + jnp.dot(c_ref[0], wc_ref[...],
                        preferred_element_type=jnp.float32)
    o_ref[...] = (acc + b_ref[...]).astype(o_ref.dtype)


def _lstm_nobias_kernel(h_ref, c_ref, wh_ref, wc_ref, o_ref):
    acc = jnp.dot(h_ref[0], wh_ref[...], preferred_element_type=jnp.float32)
    acc = acc + jnp.dot(c_ref[0], wc_ref[...],
                        preferred_element_type=jnp.float32)
    o_ref[...] = acc.astype(o_ref.dtype)


def _linear_bias_kernel(x_ref, w_ref, b_ref, o_ref):
    acc = jnp.dot(x_ref[0], w_ref[...], preferred_element_type=jnp.float32)
    o_ref[...] = (acc + b_ref[...]).astype(o_ref.dtype)


def _linear_nobias_kernel(x_ref, w_ref, o_ref):
    acc = jnp.dot(x_ref[0], w_ref[...], preferred_element_type=jnp.float32)
    o_ref[...] = acc.astype(o_ref.dtype)


# --------------------------- pallas wrappers -------------------------------- #

def _vmem_spec():
    # Whole-array-in-VMEM spec: no grid, no tiling constraint, no pipeline.
    return pl.BlockSpec(memory_space=pltpu.MemorySpace.VMEM)


def _cost(flops, *arrays, out_elems):
    itemsize = arrays[0].dtype.itemsize
    bytes_accessed = sum(int(a.size) for a in arrays) * itemsize
    bytes_accessed += out_elems * itemsize
    return pl.CostEstimate(flops=flops, transcendentals=0,
                           bytes_accessed=bytes_accessed)


def pallas_lstm_feat(h, c, wh_t, wc_t, b=None):
    """h, c: (1, B, D); wh_t, wc_t: (D, N); b: (1, N) or None -> (B, N)."""
    _, B, D = h.shape
    N = wh_t.shape[1]
    flops = 2 * 2 * B * D * N  # two (B,D)x(D,N) matmuls
    if b is not None:
        cost = _cost(flops, h, c, wh_t, wc_t, b, out_elems=B * N)
        return pl.pallas_call(
            _lstm_bias_kernel,
            out_shape=jax.ShapeDtypeStruct((B, N), h.dtype),
            in_specs=[_vmem_spec()] * 5,
            out_specs=_vmem_spec(),
            cost_estimate=cost,
        )(h, c, wh_t, wc_t, b)
    cost = _cost(flops, h, c, wh_t, wc_t, out_elems=B * N)
    return pl.pallas_call(
        _lstm_nobias_kernel,
        out_shape=jax.ShapeDtypeStruct((B, N), h.dtype),
        in_specs=[_vmem_spec()] * 4,
        out_specs=_vmem_spec(),
        cost_estimate=cost,
    )(h, c, wh_t, wc_t)


def pallas_linear_feat(x, w_t, b=None):
    """x: (1, B, D); w_t: (D, N); b: (1, N) or None -> (B, N)."""
    _, B, D = x.shape
    N = w_t.shape[1]
    flops = 2 * B * D * N
    if b is not None:
        cost = _cost(flops, x, w_t, b, out_elems=B * N)
        return pl.pallas_call(
            _linear_bias_kernel,
            out_shape=jax.ShapeDtypeStruct((B, N), x.dtype),
            in_specs=[_vmem_spec()] * 3,
            out_specs=_vmem_spec(),
            cost_estimate=cost,
        )(x, w_t, b)
    cost = _cost(flops, x, w_t, out_elems=B * N)
    return pl.pallas_call(
        _linear_nobias_kernel,
        out_shape=jax.ShapeDtypeStruct((B, N), x.dtype),
        in_specs=[_vmem_spec()] * 2,
        out_specs=_vmem_spec(),
        cost_estimate=cost,
    )(x, w_t)


# ------------------------------ module ------------------------------------- #

class Hidden2Feat:
    """JAX/Pallas port of the PyTorch Hidden2Feat module.

    Note: like the PyTorch original's .squeeze(0), this assumes the leading
    (layer) dim of the hidden states is exactly 1 (single-layer,
    unidirectional RNN state).
    """

    def __init__(self, input_size, output_size, is_lstm, has_bias=True,
                 key=jax.random.PRNGKey(0), dtype=jnp.float32):
        self.is_lstm = is_lstm
        self.has_bias = has_bias
        self.output_size = output_size

        bound = 1.0 / (input_size ** 0.5)  # PyTorch nn.Linear default init

        def make_linear(k):
            kw, kb = jax.random.split(k)
            # store W transposed: (input_size, output_size)
            w_t = jax.random.uniform(kw, (input_size, output_size),
                                     dtype, -bound, bound)
            b = (jax.random.uniform(kb, (1, output_size), dtype, -bound, bound)
                 if has_bias else None)
            return w_t, b

        if is_lstm:
            kh, kc = jax.random.split(key)
            self.wh_t, self.bh = make_linear(kh)
            self.wc_t, self.bc = make_linear(kc)
            # bh + bc summed once at init (algebraically identical, one add
            # in-kernel instead of two).
            self.b_fused = (self.bh + self.bc) if has_bias else None
        else:
            self.w_t, self.b = make_linear(key)

    def __call__(self, inputs):
        if self.is_lstm:
            h, c = inputs[0], inputs[1]           # each (1, B, D), raw
            return pallas_lstm_feat(h, c, self.wh_t, self.wc_t, self.b_fused)
        return pallas_linear_feat(inputs, self.w_t, self.b)


# ------------------------------- main -------------------------------------- #

if __name__ == "__main__":
    key = jax.random.PRNGKey(0)
    k_h, k_c, k_x, k_p1, k_p2, k_p3 = jax.random.split(key, 6)

    batch, input_size, output_size = 2, 32, 16

    # --- LSTM case: inputs is a tuple (h, c), each (1, batch, input_size) ---
    h_in = jax.random.normal(k_h, (1, batch, input_size), jnp.float32)
    c_in = jax.random.normal(k_c, (1, batch, input_size), jnp.float32)

    mod_lstm = Hidden2Feat(input_size, output_size, is_lstm=True, key=k_p1)
    out_lstm = mod_lstm((h_in, c_in))
    jax.block_until_ready(out_lstm)

    ref_lstm = (h_in[0] @ mod_lstm.wh_t + mod_lstm.bh
                + c_in[0] @ mod_lstm.wc_t + mod_lstm.bc)
    assert out_lstm.shape == (batch, output_size)
    assert jnp.allclose(out_lstm, ref_lstm, atol=1e-5, rtol=1e-5)

    # --- GRU/RNN case: inputs is (1, batch, input_size) ---
    x_in = jax.random.normal(k_x, (1, batch, input_size), jnp.float32)
    mod_lin = Hidden2Feat(input_size, output_size, is_lstm=False, key=k_p2)
    out_lin = mod_lin(x_in)
    jax.block_until_ready(out_lin)

    ref_lin = x_in[0] @ mod_lin.w_t + mod_lin.b
    assert out_lin.shape == (batch, output_size)
    assert jnp.allclose(out_lin, ref_lin, atol=1e-5, rtol=1e-5)

    # --- no-bias path (separate kernel: no bias DMA or add at all) ---
    mod_nb = Hidden2Feat(input_size, output_size, is_lstm=False,
                         has_bias=False, key=k_p3)
    out_nb = mod_nb(x_in)
    jax.block_until_ready(out_nb)
    ref_nb = x_in[0] @ mod_nb.w_t
    assert out_nb.shape == (batch, output_size)
    assert jnp.allclose(out_nb, ref_nb, atol=1e-5, rtol=1e-5)

    print("KERNEL_OK")
</pallas_src>

<mosaic_0001>
module attributes {stable_mosaic.version = 11 : i64} {
  func.func @_lstm_bias_kernel(%arg0: memref<1x2x32xf32, #tpu.memory_space<vmem>>, %arg1: memref<1x2x32xf32, #tpu.memory_space<vmem>>, %arg2: memref<32x16xf32, #tpu.memory_space<vmem>>, %arg3: memref<32x16xf32, #tpu.memory_space<vmem>>, %arg4: memref<1x16xf32, #tpu.memory_space<vmem>>, %arg5: memref<2x16xf32, #tpu.memory_space<vmem>>) attributes {dimension_semantics = [], scalar_prefetch = 0 : i64, scratch_operands = 0 : i64, tpu.core_type = #tpu.core_type<tc>} {
    %c0 = arith.constant 0 : index
    %c0_0 = arith.constant 0 : index
    %c0_1 = arith.constant 0 : index
    %0 = vector.load %arg0[%c0, %c0_0, %c0_1] : memref<1x2x32xf32, #tpu.memory_space<vmem>>, vector<1x2x32xf32>
    %1 = vector.shape_cast %0 : vector<1x2x32xf32> to vector<2x32xf32>
    %c0_2 = arith.constant 0 : index
    %c0_3 = arith.constant 0 : index
    %2 = vector.load %arg2[%c0_2, %c0_3] : memref<32x16xf32, #tpu.memory_space<vmem>>, vector<32x16xf32>
    %cst = arith.constant dense<0.000000e+00> : vector<2x16xf32>
    %3 = tpu.matmul %1, %2, %cst {dimension_numbers = #tpu.dot_dimension_numbers<[1], [0], [0], [1], [0, 0, 1, 1], [], []>} : vector<2x32xf32>, vector<32x16xf32>, vector<2x16xf32> -> vector<2x16xf32>
    %c0_4 = arith.constant 0 : index
    %c0_5 = arith.constant 0 : index
    %c0_6 = arith.constant 0 : index
    %4 = vector.load %arg1[%c0_4, %c0_5, %c0_6] : memref<1x2x32xf32, #tpu.memory_space<vmem>>, vector<1x2x32xf32>
    %5 = vector.shape_cast %4 : vector<1x2x32xf32> to vector<2x32xf32>
    %c0_7 = arith.constant 0 : index
    %c0_8 = arith.constant 0 : index
    %6 = vector.load %arg3[%c0_7, %c0_8] : memref<32x16xf32, #tpu.memory_space<vmem>>, vector<32x16xf32>
    %cst_9 = arith.constant dense<0.000000e+00> : vector<2x16xf32>
    %7 = tpu.matmul %5, %6, %cst_9 {dimension_numbers = #tpu.dot_dimension_numbers<[1], [0], [0], [1], [0, 0, 1, 1], [], []>} : vector<2x32xf32>, vector<32x16xf32>, vector<2x16xf32> -> vector<2x16xf32>
    %8 = arith.addf %3, %7 : vector<2x16xf32>
    %c0_10 = arith.constant 0 : index
    %c0_11 = arith.constant 0 : index
    %9 = vector.load %arg4[%c0_10, %c0_11] : memref<1x16xf32, #tpu.memory_space<vmem>>, vector<1x16xf32>
    %10 = vector.broadcast %9 : vector<1x16xf32> to vector<2x16xf32>
    %11 = arith.addf %8, %10 : vector<2x16xf32>
    %c0_12 = arith.constant 0 : index
    %c0_13 = arith.constant 0 : index
    %12 = vector.load %arg5[%c0_12, %c0_13] : memref<2x16xf32, #tpu.memory_space<vmem>>, vector<2x16xf32>
    tpu.vector_store %arg5[%c0_12, %c0_13], %11 {strides = array<i32>} : memref<2x16xf32, #tpu.memory_space<vmem>>, vector<2x16xf32>,
    return
  }
}

</mosaic_0001>

<llo_original>
// kernel: tpu_custom_call.1
$region0: #{tpu_custom_call.1}
  #allocation0 [shape = 'u32[]', space=smem, size = 0x4, offset = 0x4, fixed_abs, tag = 'smem constant byte address 0x4 - core index']
  #allocation1 [shape = 'u32[72,128]{1,0:T(1,128)}', space=vmem, size = 0x9000, scoped, tag = 'internal scratch']
  %s0 = inlined_call_operand.vmem [shape: f32[1,2,32], index: 0, kind: input, shape index: {}]
  %s1 = inlined_call_operand.vmem [shape: f32[1,2,32], index: 1, kind: input, shape index: {}]
  %s2 = inlined_call_operand.vmem [shape: f32[32,16], index: 2, kind: input, shape index: {}]
  %s3 = inlined_call_operand.vmem [shape: f32[32,16], index: 3, kind: input, shape index: {}]
  %s4 = inlined_call_operand.vmem [shape: f32[1,16], index: 4, kind: input, shape index: {}]
  %s5 = inlined_call_operand.hbm [shape: f32[2,16], index: 5, kind: output, shape index: {}]
  %s6 = sld [smem:[#allocation0]]
  $region30: #{tpu_custom_call.1} parent=0
    _
  %s8 = ssub.s32 1, %s6
  %s9 = scalar_select 0, %s8, %s6
  $region1: #{tpu_custom_call.1} parent=0
    #allocation2 [shape = 'u8[1024]{0}', space=vmem, size = 0x400, scoped, tag = 'output window, operand 0, single buffered']
    #allocation3 [shape = 's32[1]{0}', space=sflag, size = 0x4, scoped, tag = 'scoped memory for tpu_custom_call.1']
    %10 = vsyncpa [#allocation3], 0
    // Predicated region
    $region2: #{tpu_custom_call.1} parent=1 // pred_check
      _
    $region3: #{tpu_custom_call.1} parent=1 // pred_check_branch
      %12 = sbr.rel (0) target = $region5
    $region4: #{tpu_custom_call.1} parent=1 // pred_region
      _
    $region5: #{tpu_custom_call.1} parent=1 // pred_fallthru
      _
    // Predicated region
    $region6: #{tpu_custom_call.1} parent=1 // pred_check
      _
    $region7: #{tpu_custom_call.1} parent=1 // pred_check_branch
      %14 = sbr.rel (0) target = $region9
    $region8: #{tpu_custom_call.1} parent=1 // pred_region
      _
    $region9: #{tpu_custom_call.1} parent=1 // pred_fallthru
      _
    // Predicated region
    $region10: #{tpu_custom_call.1} parent=1 // pred_check
      _
    $region11: #{tpu_custom_call.1} parent=1 // pred_check_branch
      %16 = sbr.rel (0) target = $region13
    $region12: #{tpu_custom_call.1} parent=1 // pred_region
      _
    $region13: #{tpu_custom_call.1} parent=1 // pred_fallthru
      _
    // Predicated region
    $region14: #{tpu_custom_call.1} parent=1 // pred_check
      _
    $region15: #{tpu_custom_call.1} parent=1 // pred_check_branch
      %18 = sbr.rel (0) target = $region17
    $region16: #{tpu_custom_call.1} parent=1 // pred_region
      _
    $region17: #{tpu_custom_call.1} parent=1 // pred_fallthru
      _
    // Predicated region
    $region18: #{tpu_custom_call.1} parent=1 // pred_check
      _
    $region19: #{tpu_custom_call.1} parent=1 // pred_check_branch
      %20 = sbr.rel (0) target = $region21
    $region20: #{tpu_custom_call.1} parent=1 // pred_region
      _
    $region21: #{tpu_custom_call.1} parent=1 // pred_fallthru
      _
    %v21 = vld [vmem:[%s0] sm:$0x3]
    %v22 = vld [vmem:[%s2] sm:$0xff]
    %v23 = vld [vmem:[%s2 + $0x8] sm:$0xff]
    %v24 = vld [vmem:[%s2 + $0x10] sm:$0xff]
    %v25 = vld [vmem:[%s2 + $0x18] sm:$0xff]
    %v26 = vld [vmem:[%s1] sm:$0x3]
    %v27 = vld [vmem:[%s3] sm:$0xff]
    %v28 = vld [vmem:[%s3 + $0x8] sm:$0xff]
    %v29 = vld [vmem:[%s3 + $0x10] sm:$0xff]
    %v30 = vld [vmem:[%s3 + $0x18] sm:$0xff]
    %vm31 = vcmask 261120
    %v33 = vsel %vm31, %v26, 0
    %35 = vmatpush.msra.mxu0 0.0
    %36 = vmatpush.msra.mxu0 0.0
    %37 = vmatpush.msra.mxu0 0.0
    %38 = vmatpush.msra.mxu0 0.0
    %39 = vmatpush.msra.mxu0 0.0
    %40 = vmatpush.msra.mxu0 0.0
    %41 = vmatpush.msra.mxu0 0.0
    %42 = vmatpush.msra.mxu0 0.0
    %43 = vmatpush.msra.mxu0 0.0
    %44 = vmatpush.msra.mxu0 0.0
    %45 = vmatpush.msra.mxu0 0.0
    %46 = vmatpush.msra.mxu0 0.0
    %47 = vmatpush.msra.mxu0 %v30
    %48 = vmatpush.msra.mxu0 %v29
    %49 = vmatpush.msra.mxu0 %v28
    %50 = vmatpush.msra.mxu0 %v27
    %51 = vmatmul.f32.gmra.mxu0 %v33
    %v52 = vpop.f32.mrf.mxu0
    %v53 = vadd.f32 0.0, %v52
    %54 = vdwg.mxu0
    %v56 = vsel %vm31, %v21, 0
    %58 = vmatpush.msra.mxu0 0.0
    %59 = vmatpush.msra.mxu0 0.0
    %60 = vmatpush.msra.mxu0 0.0
    %61 = vmatpush.msra.mxu0 0.0
    %62 = vmatpush.msra.mxu0 0.0
    %63 = vmatpush.msra.mxu0 0.0
    %64 = vmatpush.msra.mxu0 0.0
    %65 = vmatpush.msra.mxu0 0.0
    %66 = vmatpush.msra.mxu0 0.0
    %67 = vmatpush.msra.mxu0 0.0
    %68 = vmatpush.msra.mxu0 0.0
    %69 = vmatpush.msra.mxu0 0.0
    %70 = vmatpush.msra.mxu0 %v25
    %71 = vmatpush.msra.mxu0 %v24
    %72 = vmatpush.msra.mxu0 %v23
    %73 = vmatpush.msra.mxu0 %v22
    %74 = vmatmul.f32.gmra.mxu0 %v56
    %v75 = vpop.f32.mrf.mxu0
    %v76 = vadd.f32 %v53, %v75
    %77 = vdwg.mxu0
    %v78 = vld [vmem:[%s4] sm:$0x1]
    %v80 = vperm.slane %v78, 0
    %v82 = vadd.f32 %v76, %v80
    %vm83 = vcmask 123904
    %84 = vst.msk [vmem:[#allocation2] sm:$0x3] %vm83, %v82
    // Predicated region
    $region22: #{tpu_custom_call.1} parent=1 // pred_check
      _
    $region23: #{tpu_custom_call.1} parent=1 // pred_check_branch
      %86 = sbr.rel (0) target = $region25
    $region24: #{tpu_custom_call.1} parent=1 // pred_region
      %88 = vsyncadd [#allocation3], 0
      %s90 = sshll.u32 [#allocation2], 4
      %s91 = int_to_ptr.vmem [resolvable:$true] %s90
      %s92 = sshll.u32 %s5, 4
      %s93 = int_to_ptr.hbm [resolvable:$true] %s92
      %95 = dma.vmem_to_hbm [thread:$0]  %s91, 32, %s93, [#allocation3]
    $region25: #{tpu_custom_call.1} parent=1 // pred_fallthru
      _
    // Predicated region
    $region26: #{tpu_custom_call.1} parent=1 // pred_check
      _
    $region27: #{tpu_custom_call.1} parent=1 // pred_check_branch
      %97 = sbr.rel (0) target = $region29
    $region28: #{tpu_custom_call.1} parent=1 // pred_region
      %99 = dma.done [#allocation3], 32
    $region29: #{tpu_custom_call.1} parent=1 // pred_fallthru
      _
    %100 = vsyncpa [#allocation3], 1

</llo_original>
